<compile_context>
chip_gen: v5e
topology: v5e:2x2
jax: 0.10.0
libtpu: 0.0.40
codegen_flags: <defaults>
</compile_context>

<pallas_src>
import math

import jax
import jax.numpy as jnp
import numpy as np
from jax.experimental import pallas as pl
from jax.experimental.pallas import tpu as pltpu

_BIG = 1e30       # additive bias for "candidate pixel not in the target set"
_NEG = -1.0       # sentinel for "query row not in the query set" (max-masked)
_F16_MAX = 65504.0


# --------------------------------------------------------------------------
# Kernel 1: boundary extraction  S = x & ~binary_erosion(x, cross, border=0)
#           (inputs are zero-padded by 1 pixel, so the 4 shifted neighbours
#            are plain static slices; binarization happens in-kernel)
# --------------------------------------------------------------------------
def _boundary_kernel(pred_ref, gt_ref, s_ref, sp_ref):
    def boundary(xp):                       # xp: (H+2, W+2), zero-padded
        xb = jnp.where(xp != 0, 1.0, 0.0).astype(jnp.float32)   # binarize
        c = xb[1:-1, 1:-1]
        up = xb[0:-2, 1:-1]
        dn = xb[2:, 1:-1]
        lf = xb[1:-1, 0:-2]
        rt = xb[1:-1, 2:]
        eroded = c * up * dn * lf * rt      # 4-neighbour erosion, border = 0
        return c * (1.0 - eroded)

    s_ref[...] = boundary(pred_ref[...])
    sp_ref[...] = boundary(gt_ref[...])


# --------------------------------------------------------------------------
# Kernel 2: symmetric Hausdorff distance between the compacted boundary sets
#   max( max_{p in S'} min_{q in S} ||p-q||, max_{p in S} min_{q in S'} ||p-q|| )
#   == max(EDT(~S)[S'], EDT(~S')[S]) == sds.max() of the reference module.
#
#   grid = (n_i [parallel], n_j [arbitrary, reduction])
#   row_ref: (TILE_I, 4) = [r, c, in_S, in_S']     for query pixels i
#   col_ref: (4, TILE_J) = [r, c, bias_S, bias_S'] for candidate pixels j
#   Per-direction tile skipping via scalar-prefetched popcounts.
# --------------------------------------------------------------------------
def _hausdorff_kernel(cnt_i_s_ref, cnt_i_sp_ref, cnt_j_s_ref, cnt_j_sp_ref,
                      row_ref, col_ref, out_ref, run_s_ref, run_sp_ref):
    i = pl.program_id(0)
    j = pl.program_id(1)

    @pl.when(j == 0)
    def _():
        run_s_ref[...] = jnp.full(run_s_ref.shape, _BIG, run_s_ref.dtype)
        run_sp_ref[...] = jnp.full(run_sp_ref.shape, _BIG, run_sp_ref.dtype)

    # d_s  = min dist to S,  consumed by query rows in S'  -> needs S cand. & S' rows
    # d_sp = min dist to S', consumed by query rows in S   -> needs S' cand. & S rows
    act_s = jnp.logical_and(cnt_j_s_ref[j] > 0, cnt_i_sp_ref[i] > 0)
    act_sp = jnp.logical_and(cnt_j_sp_ref[j] > 0, cnt_i_s_ref[i] > 0)

    @pl.when(jnp.logical_or(act_s, act_sp))
    def _():
        r_i = row_ref[:, 0:1]
        c_i = row_ref[:, 1:2]
        r_j = col_ref[0:1, :]
        c_j = col_ref[1:2, :]
        dr = r_i - r_j
        dc = c_i - c_j
        d2 = dr * dr + dc * dc              # (TILE_I, TILE_J) squared distances

        @pl.when(act_s)
        def _():
            d_s = jnp.min(d2 + col_ref[2:3, :], axis=1, keepdims=True)
            run_s_ref[...] = jnp.minimum(run_s_ref[...], d_s)

        @pl.when(act_sp)
        def _():
            d_sp = jnp.min(d2 + col_ref[3:4, :], axis=1, keepdims=True)
            run_sp_ref[...] = jnp.minimum(run_sp_ref[...], d_sp)

    @pl.when(j == pl.num_programs(1) - 1)
    def _():
        s_i = row_ref[:, 2:3]
        sp_i = row_ref[:, 3:4]
        # directed Hausdorff (squared), restricted to this tile's query rows
        a = jnp.max(jnp.where(sp_i > 0.0, run_s_ref[...], _NEG),
                    axis=0, keepdims=True)
        b = jnp.max(jnp.where(s_i > 0.0, run_sp_ref[...], _NEG),
                    axis=0, keepdims=True)
        m = jnp.maximum(a, b)                               # (1, 1)
        out_ref[...] = jnp.broadcast_to(m.reshape(1, 1, 1), (1, 1, 128))


# --------------------------------------------------------------------------
# Wrapper
# --------------------------------------------------------------------------
def _round_up(x, m):
    return ((x + m - 1) // m) * m


def surface_distance_hausdorff(pred, gt, sampling=1, precision="half",
                               tile_i=128, tile_j=2048,
                               max_boundary_pixels=None):
    pred = jnp.asarray(pred)
    gt = jnp.asarray(gt)
    if pred.dtype == jnp.bool_:
        pred = pred.astype(jnp.int8)
    if gt.dtype == jnp.bool_:
        gt = gt.astype(jnp.int8)
    H, W = pred.shape
    N = H * W

    # ---------------- boundary extraction ----------------
    pred_p = jnp.pad(pred, 1)                       # native dtype, border = 0
    gt_p = jnp.pad(gt, 1)
    vmem = pl.BlockSpec(memory_space=pltpu.MemorySpace.VMEM)
    s_b, sp_b = pl.pallas_call(
        _boundary_kernel,
        out_shape=[jax.ShapeDtypeStruct((H, W), jnp.float32),
                   jax.ShapeDtypeStruct((H, W), jnp.float32)],
        in_specs=[vmem, vmem],
        out_specs=[vmem, vmem],
        compiler_params=pltpu.CompilerParams(vmem_limit_bytes=32 * 1024 * 1024),
    )(pred_p, gt_p)

    # ---------------- compaction of the boundary point sets ----------------
    sampling = jnp.broadcast_to(jnp.asarray(sampling, jnp.float32), (2,))
    s_flat = s_b.reshape(N)
    sp_flat = sp_b.reshape(N)
    memb = jnp.maximum(s_flat, sp_flat)             # union membership (0/1)

    if max_boundary_pixels is None:
        try:
            # eager path: exact boundary size (rounded to 128 to limit recompiles)
            K = max(int(jnp.count_nonzero(memb)), 1)
        except jax.errors.ConcretizationTypeError:
            K = N                                   # safe fallback under jit
    else:
        K = max(int(max_boundary_pixels), 1)
    K = min(_round_up(K, 128), N)

    # gather member pixels to a dense prefix (non-members sort to the back and
    # are inert: membership 0, bias BIG)
    _, top_idx = jax.lax.top_k(memb, K)
    top_idx = top_idx.astype(jnp.int32)

    rr = (top_idx // W).astype(jnp.float32) * sampling[0]   # scipy EDT `sampling`
    cc = (top_idx % W).astype(jnp.float32) * sampling[1]
    s_sel = jnp.take(s_flat, top_idx)
    sp_sel = jnp.take(sp_flat, top_idx)

    # tile sizes: lane-dense j tile (multiple of 128), sublane i tile (mult. 8);
    # pad K so both tiles divide it exactly (padded pixels are inert).
    tile_j = max(128, min(tile_j, _round_up(K, 128)))
    tile_i = max(8, min(tile_i, _round_up(K, 8)))
    lcm = tile_i * tile_j // math.gcd(tile_i, tile_j)
    k_pad = _round_up(K, lcm)
    n_i, n_j = k_pad // tile_i, k_pad // tile_j
    pad = k_pad - K

    rr = jnp.pad(rr, (0, pad))
    cc = jnp.pad(cc, (0, pad))
    s_sel = jnp.pad(s_sel, (0, pad))
    sp_sel = jnp.pad(sp_sel, (0, pad))

    bias_s = jnp.where(s_sel > 0, 0.0, _BIG).astype(jnp.float32)
    bias_sp = jnp.where(sp_sel > 0, 0.0, _BIG).astype(jnp.float32)

    row_feats = jnp.stack([rr, cc, s_sel, sp_sel], axis=1)     # (k_pad, 4)
    col_feats = jnp.stack([rr, cc, bias_s, bias_sp], axis=0)   # (4, k_pad)

    # per-direction, per-tile popcounts (scalar prefetch) -> skip dead tiles
    cnt_i_s = s_sel.reshape(n_i, tile_i).sum(axis=1).astype(jnp.int32)
    cnt_i_sp = sp_sel.reshape(n_i, tile_i).sum(axis=1).astype(jnp.int32)
    cnt_j_s = s_sel.reshape(n_j, tile_j).sum(axis=1).astype(jnp.int32)
    cnt_j_sp = sp_sel.reshape(n_j, tile_j).sum(axis=1).astype(jnp.int32)

    # ---------------- Hausdorff pass ----------------
    partial = pl.pallas_call(
        _hausdorff_kernel,
        out_shape=jax.ShapeDtypeStruct((n_i, 1, 128), jnp.float32),
        grid_spec=pltpu.PrefetchScalarGridSpec(
            num_scalar_prefetch=4,
            grid=(n_i, n_j),
            in_specs=[pl.BlockSpec((tile_i, 4), lambda i, j, *_: (i, 0)),
                      pl.BlockSpec((4, tile_j), lambda i, j, *_: (0, j))],
            out_specs=pl.BlockSpec((1, 1, 128), lambda i, j, *_: (i, 0, 0)),
            scratch_shapes=[pltpu.VMEM((tile_i, 1), jnp.float32),
                            pltpu.VMEM((tile_i, 1), jnp.float32)]),
        compiler_params=pltpu.CompilerParams(
            dimension_semantics=("parallel", "arbitrary"),
            vmem_limit_bytes=32 * 1024 * 1024),
    )(cnt_i_s, cnt_i_sp, cnt_j_s, cnt_j_sp, row_feats, col_feats)

    hd2 = jnp.max(partial)                      # squared Hausdorff (-1 if empty)
    hd = jnp.sqrt(jnp.maximum(hd2, 0.0))
    if precision == "half":
        # NOTE: if one boundary set is empty the running min stays at the BIG
        # sentinel and the result is clamped to f16 max (scipy would error).
        hd = jnp.minimum(hd, _F16_MAX).astype(jnp.float16)
    return hd


# --------------------------------------------------------------------------
# Pure-numpy reference (no scipy) for sanity checking
# --------------------------------------------------------------------------
def _numpy_reference(pred, gt):
    p = np.asarray(pred) != 0
    g = np.asarray(gt) != 0

    def boundary(x):
        H, W = x.shape
        pad = np.zeros((H + 2, W + 2), dtype=bool)
        pad[1:-1, 1:-1] = x
        er = (pad[1:-1, 1:-1] & pad[:-2, 1:-1] & pad[2:, 1:-1]
              & pad[1:-1, :-2] & pad[1:-1, 2:])
        return x & ~er

    S = np.argwhere(boundary(p)).astype(np.float64)
    Sp = np.argwhere(boundary(g)).astype(np.float64)

    def directed(A, B):  # max_{a in A} min_{b in B} ||a - b||
        d = np.sqrt(((A[:, None, :] - B[None, :, :]) ** 2).sum(-1))
        return d.min(axis=1).max()

    return max(directed(Sp, S), directed(S, Sp))


if __name__ == "__main__":
    key = jax.random.PRNGKey(0)
    k1, k2 = jax.random.split(key)
    pred = (jax.random.uniform(k1, (16, 16)) > 0.55).astype(jnp.float32)
    gt = (jax.random.uniform(k2, (16, 16)) > 0.55).astype(jnp.float32)

    hd = surface_distance_hausdorff(pred, gt, sampling=1, precision="half")
    jax.block_until_ready(hd)

    ref = _numpy_reference(np.asarray(pred), np.asarray(gt))
    assert hd.dtype == jnp.float16
    assert abs(float(hd) - ref) <= max(1e-2 * ref, 5e-2), (float(hd), ref)
    print("KERNEL_OK")
</pallas_src>

<mosaic_0001>
module attributes {stable_mosaic.version = 11 : i64} {
  func.func @_boundary_kernel(%arg0: memref<18x18xf32, #tpu.memory_space<vmem>>, %arg1: memref<18x18xf32, #tpu.memory_space<vmem>>, %arg2: memref<16x16xf32, #tpu.memory_space<vmem>>, %arg3: memref<16x16xf32, #tpu.memory_space<vmem>>) attributes {dimension_semantics = [], scalar_prefetch = 0 : i64, scratch_operands = 0 : i64, tpu.core_type = #tpu.core_type<tc>} {
    %c0 = arith.constant 0 : index
    %c0_0 = arith.constant 0 : index
    %0 = vector.load %arg0[%c0, %c0_0] : memref<18x18xf32, #tpu.memory_space<vmem>>, vector<18x18xf32>
    %cst = arith.constant 0.000000e+00 : f32
    %1 = vector.broadcast %cst : f32 to vector<18x18xf32>
    %2 = arith.cmpf one, %0, %1 : vector<18x18xf32>
    %cst_1 = arith.constant 1.000000e+00 : f32
    %cst_2 = arith.constant 0.000000e+00 : f32
    %3 = vector.broadcast %cst_1 : f32 to vector<18x18xf32>
    %4 = vector.broadcast %cst_2 : f32 to vector<18x18xf32>
    %5 = arith.select %2, %3, %4 : vector<18x18xi1>, vector<18x18xf32>
    %6 = vector.extract_strided_slice %5 {offsets = [1, 1], sizes = [16, 16], strides = [1, 1]} : vector<18x18xf32> to vector<16x16xf32>
    %7 = vector.extract_strided_slice %5 {offsets = [0, 1], sizes = [16, 16], strides = [1, 1]} : vector<18x18xf32> to vector<16x16xf32>
    %8 = vector.extract_strided_slice %5 {offsets = [2, 1], sizes = [16, 16], strides = [1, 1]} : vector<18x18xf32> to vector<16x16xf32>
    %9 = vector.extract_strided_slice %5 {offsets = [1, 0], sizes = [16, 16], strides = [1, 1]} : vector<18x18xf32> to vector<16x16xf32>
    %10 = vector.extract_strided_slice %5 {offsets = [1, 2], sizes = [16, 16], strides = [1, 1]} : vector<18x18xf32> to vector<16x16xf32>
    %11 = arith.mulf %6, %7 : vector<16x16xf32>
    %12 = arith.mulf %11, %8 : vector<16x16xf32>
    %13 = arith.mulf %12, %9 : vector<16x16xf32>
    %14 = arith.mulf %13, %10 : vector<16x16xf32>
    %cst_3 = arith.constant 1.000000e+00 : f32
    %15 = vector.broadcast %cst_3 : f32 to vector<16x16xf32>
    %16 = arith.subf %15, %14 : vector<16x16xf32>
    %17 = arith.mulf %6, %16 : vector<16x16xf32>
    %c0_4 = arith.constant 0 : index
    %c0_5 = arith.constant 0 : index
    %18 = vector.load %arg2[%c0_4, %c0_5] : memref<16x16xf32, #tpu.memory_space<vmem>>, vector<16x16xf32>
    tpu.vector_store %arg2[%c0_4, %c0_5], %17 {strides = array<i32>} : memref<16x16xf32, #tpu.memory_space<vmem>>, vector<16x16xf32>,
    %c0_6 = arith.constant 0 : index
    %c0_7 = arith.constant 0 : index
    %19 = vector.load %arg1[%c0_6, %c0_7] : memref<18x18xf32, #tpu.memory_space<vmem>>, vector<18x18xf32>
    %cst_8 = arith.constant 0.000000e+00 : f32
    %20 = vector.broadcast %cst_8 : f32 to vector<18x18xf32>
    %21 = arith.cmpf one, %19, %20 : vector<18x18xf32>
    %cst_9 = arith.constant 1.000000e+00 : f32
    %cst_10 = arith.constant 0.000000e+00 : f32
    %22 = vector.broadcast %cst_9 : f32 to vector<18x18xf32>
    %23 = vector.broadcast %cst_10 : f32 to vector<18x18xf32>
    %24 = arith.select %21, %22, %23 : vector<18x18xi1>, vector<18x18xf32>
    %25 = vector.extract_strided_slice %24 {offsets = [1, 1], sizes = [16, 16], strides = [1, 1]} : vector<18x18xf32> to vector<16x16xf32>
    %26 = vector.extract_strided_slice %24 {offsets = [0, 1], sizes = [16, 16], strides = [1, 1]} : vector<18x18xf32> to vector<16x16xf32>
    %27 = vector.extract_strided_slice %24 {offsets = [2, 1], sizes = [16, 16], strides = [1, 1]} : vector<18x18xf32> to vector<16x16xf32>
    %28 = vector.extract_strided_slice %24 {offsets = [1, 0], sizes = [16, 16], strides = [1, 1]} : vector<18x18xf32> to vector<16x16xf32>
    %29 = vector.extract_strided_slice %24 {offsets = [1, 2], sizes = [16, 16], strides = [1, 1]} : vector<18x18xf32> to vector<16x16xf32>
    %30 = arith.mulf %25, %26 : vector<16x16xf32>
    %31 = arith.mulf %30, %27 : vector<16x16xf32>
    %32 = arith.mulf %31, %28 : vector<16x16xf32>
    %33 = arith.mulf %32, %29 : vector<16x16xf32>
    %cst_11 = arith.constant 1.000000e+00 : f32
    %34 = vector.broadcast %cst_11 : f32 to vector<16x16xf32>
    %35 = arith.subf %34, %33 : vector<16x16xf32>
    %36 = arith.mulf %25, %35 : vector<16x16xf32>
    %c0_12 = arith.constant 0 : index
    %c0_13 = arith.constant 0 : index
    %37 = vector.load %arg3[%c0_12, %c0_13] : memref<16x16xf32, #tpu.memory_space<vmem>>, vector<16x16xf32>
    tpu.vector_store %arg3[%c0_12, %c0_13], %36 {strides = array<i32>} : memref<16x16xf32, #tpu.memory_space<vmem>>, vector<16x16xf32>,
    return
  }
}

</mosaic_0001>

<llo_original>
// kernel: tpu_custom_call.1
$region0: #{tpu_custom_call.1}
  #allocation0 [shape = 'u32[]', space=smem, size = 0x4, offset = 0x4, fixed_abs, tag = 'smem constant byte address 0x4 - core index']
  #allocation1 [shape = 'u32[72,128]{1,0:T(1,128)}', space=vmem, size = 0x9000, scoped, tag = 'internal scratch']
  %s0 = inlined_call_operand.hbm [shape: f32[18,18], index: 0, kind: input, shape index: {}]
  %s1 = inlined_call_operand.hbm [shape: f32[18,18], index: 1, kind: input, shape index: {}]
  %s2 = inlined_call_operand.hbm [shape: f32[16,16], index: 2, kind: output, shape index: {0}]
  %s3 = inlined_call_operand.hbm [shape: f32[16,16], index: 3, kind: output, shape index: {1}]
  %4 = xla_tuple %s2, %s3
  %s5 = sld [smem:[#allocation0]]
  $region34: #{tpu_custom_call.1} parent=0
    _
  %s7 = ssub.s32 1, %s5
  %s8 = scalar_select 0, %s7, %s5
  $region1: #{tpu_custom_call.1} parent=0
    #allocation2 [shape = 'u8[12288]{0}', space=vmem, size = 0x3000, scoped, tag = 'input window, operand 0, single buffered']
    #allocation3 [shape = 's32[1]{0}', space=sflag, size = 0x4, scoped, tag = 'scoped memory for tpu_custom_call.1']
    #allocation4 [shape = 's32[1]{0}', space=sflag, size = 0x4, scoped, tag = 'scoped memory for tpu_custom_call.1']
    #allocation5 [shape = 'u8[12288]{0}', space=vmem, size = 0x3000, scoped, tag = 'input window, operand 1, single buffered']
    #allocation6 [shape = 's32[1]{0}', space=sflag, size = 0x4, scoped, tag = 'scoped memory for tpu_custom_call.1']
    #allocation7 [shape = 'u8[8192]{0}', space=vmem, size = 0x2000, scoped, tag = 'output window, operand 0, single buffered']
    #allocation8 [shape = 'u8[8192]{0}', space=vmem, size = 0x2000, scoped, tag = 'output window, operand 1, single buffered']
    #allocation9 [shape = 's32[1]{0}', space=sflag, size = 0x4, scoped, tag = 'scoped memory for tpu_custom_call.1']
    %9 = vsyncpa [#allocation3], 0
    %10 = vsyncpa [#allocation6], 0
    %11 = vsyncpa [#allocation4], 0
    %12 = vsyncpa [#allocation9], 0
    // Predicated region
    $region2: #{tpu_custom_call.1} parent=1 // pred_check
      _
    $region3: #{tpu_custom_call.1} parent=1 // pred_check_branch
      %14 = sbr.rel (0) target = $region5
    $region4: #{tpu_custom_call.1} parent=1 // pred_region
      %16 = vsyncadd [#allocation3], 0
      %s17 = sshll.u32 %s0, 4
      %s18 = int_to_ptr.hbm [resolvable:$true] %s17
      %s19 = sshll.u32 [#allocation2], 4
      %s20 = int_to_ptr.vmem [resolvable:$true] %s19
      %25 = dma.hbm_to_vmem [thread:$0]  %s18, 384, %s20, [#allocation3], 128, 128, 8
    $region5: #{tpu_custom_call.1} parent=1 // pred_fallthru
      _
    // Predicated region
    $region6: #{tpu_custom_call.1} parent=1 // pred_check
      _
    $region7: #{tpu_custom_call.1} parent=1 // pred_check_branch
      %27 = sbr.rel (0) target = $region9
    $region8: #{tpu_custom_call.1} parent=1 // pred_region
      %29 = vsyncadd [#allocation6], 0
      %s30 = sshll.u32 %s1, 4
      %s31 = int_to_ptr.hbm [resolvable:$true] %s30
      %s32 = sshll.u32 [#allocation5], 4
      %s33 = int_to_ptr.vmem [resolvable:$true] %s32
      %38 = dma.hbm_to_vmem [thread:$0]  %s31, 384, %s33, [#allocation6], 128, 128, 8
    $region9: #{tpu_custom_call.1} parent=1 // pred_fallthru
      _
    // Predicated region
    $region10: #{tpu_custom_call.1} parent=1 // pred_check
      _
    $region11: #{tpu_custom_call.1} parent=1 // pred_check_branch
      %40 = sbr.rel (0) target = $region13
    $region12: #{tpu_custom_call.1} parent=1 // pred_region
      %42 = dma.done [#allocation3], 384
    $region13: #{tpu_custom_call.1} parent=1 // pred_fallthru
      _
    // Predicated region
    $region14: #{tpu_custom_call.1} parent=1 // pred_check
      _
    $region15: #{tpu_custom_call.1} parent=1 // pred_check_branch
      %44 = sbr.rel (0) target = $region17
    $region16: #{tpu_custom_call.1} parent=1 // pred_region
      %46 = dma.done [#allocation6], 384
    $region17: #{tpu_custom_call.1} parent=1 // pred_fallthru
      _
    %v47 = vld [vmem:[#allocation2] sm:$0xff]
    %v48 = vld [vmem:[#allocation2 + $0x8] sm:$0xff]
    %v49 = vld [vmem:[#allocation2 + $0x10] sm:$0x3]
    %vm50 = vcmp.ne.f32.partialorder %v47, 0.0
    %vm51 = vcmp.ne.f32.partialorder %v48, 0.0
    %vm52 = vcmp.ne.f32.partialorder %v49, 0.0
    %v53 = vsel %vm50, 1.0, 0.0
    %v54 = vsel %vm51, 1.0, 0.0
    %v55 = vsel %vm52, 1.0, 0.0
    %vm58 = vcmask 1040384
    %v59 = vrot.slane %v53, 7
    %v60 = vrot.slane %v54, 7
    %v61 = vsel %vm58, %v59, %v60
    %v65 = vmul.f32 %v53, %v59
    %v66 = vmul.f32 %v54, %v61
    %v67 = vmul.f32 %v55, %v60
    %vm69 = vcmask 1046528
    %v70 = vrot.slane %v53, 1
    %v71 = vrot.slane %v54, 1
    %v72 = vsel %vm69, %v70, %v71
    %v73 = vrot.slane %v55, 1
    %v74 = vsel %vm69, %v71, %v73
    %v78 = vmul.f32 %v65, %v72
    %v79 = vmul.f32 %v66, %v74
    %v80 = vmul.f32 %v67, %v73
    %81 = vrot.lane.b32.xlu0 %v53, 1
    %v82 = vpop.permute.xlu0 %81
    %83 = vrot.lane.b32.xlu0 %v54, 1
    %v84 = vpop.permute.xlu0 %83
    %85 = vrot.lane.b32.xlu0 %v55, 1
    %v86 = vpop.permute.xlu0 %85
    %v90 = vmul.f32 %v78, %v82
    %v91 = vmul.f32 %v79, %v84
    %v92 = vmul.f32 %v80, %v86
    %93 = vrot.lane.b32.xlu0 %v53, 127
    %v94 = vpop.permute.xlu0 %93
    %95 = vrot.lane.b32.xlu0 %v54, 127
    %v96 = vpop.permute.xlu0 %95
    %97 = vrot.lane.b32.xlu0 %v55, 127
    %v98 = vpop.permute.xlu0 %97
    %v102 = vmul.f32 %v90, %v94
    %v103 = vmul.f32 %v91, %v96
    %v104 = vmul.f32 %v92, %v98
    %v105 = vsub.f32 1.0, %v102
    %v106 = vsub.f32 1.0, %v103
    %v107 = vsub.f32 1.0, %v104
    %v108 = vmul.f32 %v53, %v105
    %v109 = vmul.f32 %v54, %v106
    %v110 = vmul.f32 %v55, %v107
    %114 = vrot.lane.b32.xlu0 %v108, 127
    %v115 = vpop.permute.xlu0 %114
    %116 = vrot.lane.b32.xlu0 %v109, 127
    %v117 = vpop.permute.xlu0 %116
    %118 = vrot.lane.b32.xlu0 %v110, 127
    %v119 = vpop.permute.xlu0 %118
    %vm123 = vcmask 130049
    %124 = vst.msk [vmem:[#allocation7 - $0x1] sm:$0xfe] %vm123, %v115
    %vm125 = vcmask 130048
    %126 = vst.msk [vmem:[#allocation7 + $0x7] sm:$0xff] %vm125, %v117
    %vm127 = vcmask 122880
    %128 = vst.msk [vmem:[#allocation7 + $0xf] sm:$0x1] %vm127, %v119
    %v129 = vld [vmem:[#allocation5] sm:$0xff]
    %v130 = vld [vmem:[#allocation5 + $0x8] sm:$0xff]
    %v131 = vld [vmem:[#allocation5 + $0x10] sm:$0x3]
    %vm132 = vcmp.ne.f32.partialorder %v129, 0.0
    %vm133 = vcmp.ne.f32.partialorder %v130, 0.0
    %vm134 = vcmp.ne.f32.partialorder %v131, 0.0
    %v135 = vsel %vm132, 1.0, 0.0
    %v136 = vsel %vm133, 1.0, 0.0
    %v137 = vsel %vm134, 1.0, 0.0
    %v140 = vrot.slane %v135, 7
    %v141 = vrot.slane %v136, 7
    %v142 = vsel %vm58, %v140, %v141
    %v146 = vmul.f32 %v135, %v140
    %v147 = vmul.f32 %v136, %v142
    %v148 = vmul.f32 %v137, %v141
    %v150 = vrot.slane %v135, 1
    %v151 = vrot.slane %v136, 1
    %v152 = vsel %vm69, %v150, %v151
    %v153 = vrot.slane %v137, 1
    %v154 = vsel %vm69, %v151, %v153
    %v158 = vmul.f32 %v146, %v152
    %v159 = vmul.f32 %v147, %v154
    %v160 = vmul.f32 %v148, %v153
    %161 = vrot.lane.b32.xlu0 %v135, 1
    %v162 = vpop.permute.xlu0 %161
    %163 = vrot.lane.b32.xlu0 %v136, 1
    %v164 = vpop.permute.xlu0 %163
    %165 = vrot.lane.b32.xlu0 %v137, 1
    %v166 = vpop.permute.xlu0 %165
    %v170 = vmul.f32 %v158, %v162
    %v171 = vmul.f32 %v159, %v164
    %v172 = vmul.f32 %v160, %v166
    %173 = vrot.lane.b32.xlu0 %v135, 127
    %v174 = vpop.permute.xlu0 %173
    %175 = vrot.lane.b32.xlu0 %v136, 127
    %v176 = vpop.permute.xlu0 %175
    %177 = vrot.lane.b32.xlu0 %v137, 127
    %v178 = vpop.permute.xlu0 %177
    %v182 = vmul.f32 %v170, %v174
    %v183 = vmul.f32 %v171, %v176
    %v184 = vmul.f32 %v172, %v178
    %v185 = vsub.f32 1.0, %v182
    %v186 = vsub.f32 1.0, %v183
    %v187 = vsub.f32 1.0, %v184
    %v188 = vmul.f32 %v135, %v185
    %v189 = vmul.f32 %v136, %v186
    %v190 = vmul.f32 %v137, %v187
    %194 = vrot.lane.b32.xlu0 %v188, 127
    %v195 = vpop.permute.xlu0 %194
    %196 = vrot.lane.b32.xlu0 %v189, 127
    %v197 = vpop.permute.xlu0 %196
    %198 = vrot.lane.b32.xlu0 %v190, 127
    %v199 = vpop.permute.xlu0 %198
    %203 = vst.msk [vmem:[#allocation8 - $0x1] sm:$0xfe] %vm123, %v195
    %204 = vst.msk [vmem:[#allocation8 + $0x7] sm:$0xff] %vm125, %v197
    %205 = vst.msk [vmem:[#allocation8 + $0xf] sm:$0x1] %vm127, %v199
    // Predicated region
    $region18: #{tpu_custom_call.1} parent=1 // pred_check
      _
    $region19: #{tpu_custom_call.1} parent=1 // pred_check_branch
      %207 = sbr.rel (0) target = $region21
    $region20: #{tpu_custom_call.1} parent=1 // pred_region
      %209 = vsyncadd [#allocation4], 0
      %s210 = sshll.u32 [#allocation7], 4
      %s211 = int_to_ptr.vmem [resolvable:$true] %s210
      %s212 = sshll.u32 %s2, 4
      %s213 = int_to_ptr.hbm [resolvable:$true] %s212
      %218 = dma.vmem_to_hbm [thread:$0]  %s211, 256, %s213, [#allocation4], 128, 128, 8
    $region21: #{tpu_custom_call.1} parent=1 // pred_fallthru
      _
    // Predicated region
    $region22: #{tpu_custom_call.1} parent=1 // pred_check
      _
    $region23: #{tpu_custom_call.1} parent=1 // pred_check_branch
      %220 = sbr.rel (0) target = $region25
    $region24: #{tpu_custom_call.1} parent=1 // pred_region
      %222 = vsyncadd [#allocation9], 0
      %s223 = sshll.u32 [#allocation8], 4
      %s224 = int_to_ptr.vmem [resolvable:$true] %s223
      %s225 = sshll.u32 %s3, 4
      %s226 = int_to_ptr.hbm [resolvable:$true] %s225
      %231 = dma.vmem_to_hbm [thread:$0]  %s224, 256, %s226, [#allocation9], 128, 128, 8
    $region25: #{tpu_custom_call.1} parent=1 // pred_fallthru
      _
    // Predicated region
    $region26: #{tpu_custom_call.1} parent=1 // pred_check
      _
    $region27: #{tpu_custom_call.1} parent=1 // pred_check_branch
      %233 = sbr.rel (0) target = $region29
    $region28: #{tpu_custom_call.1} parent=1 // pred_region
      %235 = dma.done [#allocation4], 256
    $region29: #{tpu_custom_call.1} parent=1 // pred_fallthru
      _
    // Predicated region
    $region30: #{tpu_custom_call.1} parent=1 // pred_check
      _
    $region31: #{tpu_custom_call.1} parent=1 // pred_check_branch
      %237 = sbr.rel (0) target = $region33
    $region32: #{tpu_custom_call.1} parent=1 // pred_region
      %239 = dma.done [#allocation9], 256
    $region33: #{tpu_custom_call.1} parent=1 // pred_fallthru
      _
    %240 = vsyncpa [#allocation3], 1
    %241 = vsyncpa [#allocation6], 1
    %242 = vsyncpa [#allocation4], 1
    %243 = vsyncpa [#allocation9], 1

</llo_original>
